<compile_context>
chip_gen: v7x
topology: tpu7x:2x2x1
jax: 0.10.0
libtpu: 0.0.40
codegen_flags: <defaults>
</compile_context>

<pallas_src>
from functools import partial

import jax
import jax.numpy as jnp
import numpy as np
from jax.experimental import pallas as pl
from jax.experimental.pallas import tpu as pltpu

LANE = 128
SUBLANE_F32 = 8
_BATCH_BUCKETS = (8, 16, 32, 64, 128, 256)


def _round_up(x, m):
    return ((x + m - 1) // m) * m


def _pick_tile_k(d_in_pad):
    # Prefer MXU-depth-friendly multiples of 256; 128 always divides d_in_pad.
    for cand in (512, 256, 128):
        if d_in_pad >= cand and d_in_pad % cand == 0:
            return cand
    return d_in_pad


# --------------------------------------------------------------------- kernel
def _moe_fwd_kernel(x_ref, wb_ref, bb_ref, wc_ref, bc_ref, out_ref, acc_ref):
    """Grid = (batch_tiles, k_tiles); K is the reduction axis (last, 'arbitrary').

    x_ref : (tile_b, tile_k) f32  -- cast to bf16 in-kernel (no wrapper pass)
    wb_ref: (tile_k, e_pad)  bf16 -- streamed over K (double-buffered)
    bb_ref: (1, e_pad)       f32  -- resident, single-buffered
    wc_ref: (e_pad, n_pad)   bf16 -- resident, single-buffered
    bc_ref: (1, n_pad)       f32  -- resident, single-buffered
    acc_ref: (tile_b, e_pad) f32 VMEM scratch accumulator
    """
    k = pl.program_id(1)

    @pl.when(k == 0)
    def _():
        acc_ref[...] = jnp.zeros_like(acc_ref)

    # features partial-sum: x_k @ Wb_k  (bf16 operands, f32 MXU accumulation)
    acc_ref[...] += jnp.dot(
        x_ref[...].astype(jnp.bfloat16),
        wb_ref[...],
        preferred_element_type=jnp.float32,
    )

    @pl.when(k == pl.num_programs(1) - 1)
    def _():
        feat = jnp.maximum(acc_ref[...] + bb_ref[...], 0.0)
        # logits = relu(x @ Wb + bb) @ Wc + bc   (concatenated, padded heads)
        logits = jnp.dot(
            feat.astype(jnp.bfloat16), wc_ref[...],
            preferred_element_type=jnp.float32,
        )
        out_ref[...] = (logits + bc_ref[...]).astype(out_ref.dtype)


@partial(jax.jit, static_argnames=("tile_b", "tile_k"))
def _moe_forward_jit(x_pad, wb, bb, wc, bc, *, tile_b, tile_k):
    """x_pad: [B_pad, D_pad] f32; wb: [D_pad, E_pad] bf16; bb: [1, E_pad] f32;
    wc: [E_pad, N_pad] bf16; bc: [1, N_pad] f32.  All padded dims static."""
    b_pad, d_pad = x_pad.shape
    e_pad = wb.shape[1]
    n_pad = wc.shape[1]
    num_b = b_pad // tile_b
    num_k = d_pad // tile_k
    grid = (num_b, num_k)

    # Batch-parallel only pays off with enough tiles (otherwise it just
    # duplicates weight DMA across v7x's two TensorCores).
    batch_sem = "parallel" if num_b >= 4 else "arbitrary"

    # VMEM budget: double-buffered streaming blocks + single-buffered residents
    # + accumulator, with ~50% headroom.
    vmem_bytes = (
        tile_b * tile_k * 4 * 2          # x tile (f32, double-buffered)
        + tile_k * e_pad * 2 * 2         # wb tile (bf16, double-buffered)
        + e_pad * 4                      # bb (single-buffered)
        + e_pad * n_pad * 2              # wc (single-buffered)
        + n_pad * 4                      # bc (single-buffered)
        + tile_b * n_pad * 4 * 2         # out tile (double-buffered)
        + tile_b * e_pad * 4             # accumulator scratch
    )
    vmem_limit = int(vmem_bytes * 1.5) + (2 << 20)
    vmem_limit = max(vmem_limit, 16 << 20)
    vmem_limit = min(vmem_limit, 64 << 20)   # stay under v7x physical VMEM

    flops = 2 * b_pad * d_pad * e_pad + 2 * b_pad * e_pad * n_pad
    bytes_accessed = (
        b_pad * d_pad * 4
        + d_pad * e_pad * 2
        + e_pad * 4
        + e_pad * n_pad * 2
        + n_pad * 4
        + b_pad * n_pad * 4
    )

    return pl.pallas_call(
        _moe_fwd_kernel,
        out_shape=jax.ShapeDtypeStruct((b_pad, n_pad), jnp.float32),
        grid_spec=pltpu.PrefetchScalarGridSpec(
            num_scalar_prefetch=0,
            grid=grid,
            in_specs=[
                # Activations: stream over batch and K.
                pl.BlockSpec((tile_b, tile_k), lambda i, k: (i, k)),
                # Backbone weight: stream (tile_k, E_pad) slices over K.
                pl.BlockSpec((tile_k, e_pad), lambda i, k: (k, 0)),
                # Constant-index residents: single buffer (index never changes).
                pl.BlockSpec((1, e_pad), lambda i, k: (0, 0),
                             pipeline_mode=pl.Buffered(1)),
                pl.BlockSpec((e_pad, n_pad), lambda i, k: (0, 0),
                             pipeline_mode=pl.Buffered(1)),
                pl.BlockSpec((1, n_pad), lambda i, k: (0, 0),
                             pipeline_mode=pl.Buffered(1)),
            ],
            out_specs=pl.BlockSpec((tile_b, n_pad), lambda i, k: (i, 0)),
            scratch_shapes=[pltpu.VMEM((tile_b, e_pad), jnp.float32)],
        ),
        compiler_params=pltpu.CompilerParams(
            dimension_semantics=(batch_sem, "arbitrary"),
            vmem_limit_bytes=vmem_limit,
        ),
        cost_estimate=pl.CostEstimate(
            flops=flops, transcendentals=0, bytes_accessed=bytes_accessed,
        ),
    )(x_pad, wb, bb, wc, bc)


# ---------------------------------------------------------------------- model
class PallasMoEModel:
    """JAX/Pallas mirror of the PyTorch Model module."""

    def __init__(self, key, in_dim, embd_dim, init_cls_num, inc_cls_num, task_num):
        self._cur_task_id = -1
        self.task_num = task_num
        self.in_dim = in_dim
        self.embd_dim = embd_dim
        self.e_pad = _round_up(embd_dim, LANE)
        self.d_pad = _round_up(in_dim, LANE)
        self.tile_k = _pick_tile_k(self.d_pad)

        keys = jax.random.split(key, 4 * task_num)
        ki = iter(keys)

        # Backbone: one linear "expert" per task (selected by expert_id).
        self.backbone_w = [
            0.02 * jax.random.normal(next(ki), (in_dim, embd_dim), jnp.float32)
            for _ in range(task_num)
        ]
        self.backbone_b = [
            0.02 * jax.random.normal(next(ki), (1, embd_dim), jnp.float32)
            for _ in range(task_num)
        ]

        # classifier_pool: Linear(embd_dim, init_cls_num)
        #                + (task_num-1) x Linear(embd_dim, inc_cls_num)
        cls_sizes = [init_cls_num] + [inc_cls_num] * (task_num - 1)
        self.cls_sizes = cls_sizes
        self.cls_w = [
            0.02 * jax.random.normal(next(ki), (embd_dim, n), jnp.float32)
            for n in cls_sizes
        ]
        self.cls_b = [
            0.02 * jax.random.normal(next(ki), (1, n), jnp.float32) for n in cls_sizes
        ]

        # Static lane-dense output width shared by every head-subset / task
        # (one Mosaic compile for training AND inference paths, every task).
        self.n_pad = _round_up(sum(cls_sizes), LANE)

        # One-time (D_pad, E_pad)-padded bf16 backbone weights (zero pad ->
        # identical math; zero K rows x zero x cols contribute exactly 0).
        dp = self.d_pad - in_dim
        ep = self.e_pad - embd_dim
        self._wb_pad = [
            jnp.pad(w, ((0, dp), (0, ep))).astype(jnp.bfloat16)
            for w in self.backbone_w
        ]
        self._bb_pad = [jnp.pad(b, ((0, 0), (0, ep))) for b in self.backbone_b]

        # Cache of padded concatenated classifier heads, keyed by head tuple.
        self._cls_cache = {}

    # ------------------------------------------------------------------ utils
    def update_fc(self):
        self._cur_task_id += 1

    @staticmethod
    def _flatten(x):
        # NCHW -> [B, C*H*W]
        return x.reshape(x.shape[0], -1)

    def _padded_heads(self, heads):
        key = tuple(heads)
        cached = self._cls_cache.get(key)
        if cached is None:
            wc = jnp.concatenate([self.cls_w[i] for i in heads], axis=1)
            bc = jnp.concatenate([self.cls_b[i] for i in heads], axis=1)
            width = wc.shape[1]
            wc = jnp.pad(
                wc, ((0, self.e_pad - self.embd_dim), (0, self.n_pad - width))
            ).astype(jnp.bfloat16)
            bc = jnp.pad(bc, ((0, 0), (0, self.n_pad - width)))
            cached = (wc, bc, width)
            self._cls_cache[key] = cached
        return cached

    @staticmethod
    def _pad_batch(xf):
        # Bucketed batch padding -> bounded recompilation churn.
        b = xf.shape[0]
        b_pad = None
        for bucket in _BATCH_BUCKETS:
            if b <= bucket:
                b_pad = bucket
                break
        if b_pad is None:
            b_pad = _round_up(b, 256)
        tile_b = min(b_pad, 256)
        if b_pad != b:
            xf = jnp.pad(xf, ((0, b_pad - b), (0, 0)))
        return xf, tile_b

    # --------------------------------------------------------------- public
    def get_feature(self, x, expert_id):
        # Pure-JAX reference of the backbone (glue / debugging only).
        xf = self._flatten(x)
        return jnp.maximum(
            xf @ self.backbone_w[expert_id] + self.backbone_b[expert_id], 0.0
        )

    def forward(self, x, expert_id, inference=False):
        xf = self._flatten(x)
        b = xf.shape[0]
        if self.d_pad != self.in_dim:
            xf = jnp.pad(xf, ((0, 0), (0, self.d_pad - self.in_dim)))
        xf_pad, tile_b = self._pad_batch(xf)  # stays f32; cast happens in-kernel

        wb = self._wb_pad[expert_id]
        bb = self._bb_pad[expert_id]
        if inference:
            heads = list(range(self._cur_task_id + 1))
        else:
            heads = [self._cur_task_id]
        wc, bc, width = self._padded_heads(heads)

        out = _moe_forward_jit(
            xf_pad, wb, bb, wc, bc, tile_b=tile_b, tile_k=self.tile_k
        )
        return out[:b, :width]

    def fc_only(self, x_features, expert_id):
        # TODO(synk): fc_only consumes precomputed features; kept as thin JAX
        # glue around the concatenated-head matmul (not the hot path). Note the
        # PyTorch module indexes heads by expert_id here, not _cur_task_id.
        wc = jnp.concatenate([self.cls_w[i] for i in range(expert_id + 1)], axis=1)
        bc = jnp.concatenate([self.cls_b[i] for i in range(expert_id + 1)], axis=1)
        return x_features @ wc + bc


# ------------------------------------------------------------------ reference
def _ref_forward_bf16(model, x, expert_id, heads):
    """Pure-JAX reference with the same bf16-operand / f32-accumulate recipe."""
    xf = model._flatten(x).astype(jnp.bfloat16)
    wb = model.backbone_w[expert_id].astype(jnp.bfloat16)
    feat = (
        jnp.dot(xf, wb, preferred_element_type=jnp.float32)
        + model.backbone_b[expert_id]
    )
    feat = jnp.maximum(feat, 0.0).astype(jnp.bfloat16)
    wc = jnp.concatenate([model.cls_w[i] for i in heads], axis=1).astype(jnp.bfloat16)
    bc = jnp.concatenate([model.cls_b[i] for i in heads], axis=1)
    return jnp.dot(feat, wc, preferred_element_type=jnp.float32) + bc


def _ref_forward_f32(model, x, expert_id, heads):
    feat = model.get_feature(x, expert_id)
    wc = jnp.concatenate([model.cls_w[i] for i in heads], axis=1)
    bc = jnp.concatenate([model.cls_b[i] for i in heads], axis=1)
    return feat @ wc + bc


if __name__ == "__main__":
    key = jax.random.PRNGKey(0)
    kparam, kx, kx2 = jax.random.split(key, 3)

    # Small shapes consistent with the module's forward.
    B, C, H, W = 2, 4, 16, 16
    embd_dim, init_cls_num, inc_cls_num, task_num = 32, 4, 4, 3
    in_dim = C * H * W

    model = PallasMoEModel(
        kparam, in_dim, embd_dim, init_cls_num, inc_cls_num, task_num
    )
    model.update_fc()  # task 0
    model.update_fc()  # task 1  -> _cur_task_id == 1

    x = jax.random.normal(kx, (B, C, H, W), jnp.float32)

    # Training path: only classifier_pool[_cur_task_id]
    logits_train = model.forward(x, expert_id=1, inference=False)
    # Inference path: concat of classifier_pool[:_cur_task_id + 1]
    logits_inf = model.forward(x, expert_id=1, inference=True)

    jax.block_until_ready(logits_train)
    jax.block_until_ready(logits_inf)

    assert logits_train.shape == (B, inc_cls_num)
    assert logits_inf.shape == (B, init_cls_num + inc_cls_num)

    # Tight check against a reference using the same bf16/f32-acc recipe.
    ref_train_bf16 = _ref_forward_bf16(model, x, expert_id=1, heads=[1])
    ref_inf_bf16 = _ref_forward_bf16(model, x, expert_id=1, heads=[0, 1])
    assert np.allclose(np.asarray(logits_train), np.asarray(ref_train_bf16),
                       atol=5e-3, rtol=5e-3)
    assert np.allclose(np.asarray(logits_inf), np.asarray(ref_inf_bf16),
                       atol=5e-3, rtol=5e-3)

    # Loose sanity check against the full-f32 math of the PyTorch spec.
    ref_train_f32 = _ref_forward_f32(model, x, expert_id=1, heads=[1])
    ref_inf_f32 = _ref_forward_f32(model, x, expert_id=1, heads=[0, 1])
    assert np.allclose(np.asarray(logits_train), np.asarray(ref_train_f32),
                       atol=5e-2, rtol=5e-2)
    assert np.allclose(np.asarray(logits_inf), np.asarray(ref_inf_f32),
                       atol=5e-2, rtol=5e-2)

    # Second batch size hits the same padding bucket (8) -> no recompile, and
    # exercises the cached padded-heads path again.
    x2 = jax.random.normal(kx2, (5, C, H, W), jnp.float32)
    logits2 = model.forward(x2, expert_id=0, inference=True)
    jax.block_until_ready(logits2)
    assert logits2.shape == (5, init_cls_num + inc_cls_num)
    ref2 = _ref_forward_f32(model, x2, expert_id=0, heads=[0, 1])
    assert np.allclose(np.asarray(logits2), np.asarray(ref2),
                       atol=5e-2, rtol=5e-2)

    print("KERNEL_OK")
</pallas_src>

<mosaic_0001>
module attributes {stable_mosaic.version = 11 : i64} {
  func.func @_moe_fwd_kernel(%arg0: i32, %arg1: i32, %arg2: memref<8x512xf32, #tpu.memory_space<vmem>>, %arg3: memref<512x128xbf16, #tpu.memory_space<vmem>>, %arg4: memref<1x128xf32, #tpu.memory_space<vmem>>, %arg5: memref<128x128xbf16, #tpu.memory_space<vmem>>, %arg6: memref<1x128xf32, #tpu.memory_space<vmem>>, %arg7: memref<8x128xf32, #tpu.memory_space<vmem>>, %arg8: memref<8x128xf32, #tpu.memory_space<vmem>>) attributes {dimension_semantics = [#tpu.dimension_semantics<arbitrary>, #tpu.dimension_semantics<arbitrary>], iteration_bounds = array<i64: 1, 2>, scalar_prefetch = 0 : i64, scratch_operands = 1 : i64, tpu.core_type = #tpu.core_type<tc>, window_params = [{transform_indices = @transform_0, window_bounds = array<i64: 8, 512>}, {transform_indices = @transform_1, window_bounds = array<i64: 512, 128>}, {pipeline_mode = #tpu.pipeline_mode<synchronous>, transform_indices = @transform_2, window_bounds = array<i64: 1, 128>}, {pipeline_mode = #tpu.pipeline_mode<synchronous>, transform_indices = @transform_3, window_bounds = array<i64: 128, 128>}, {pipeline_mode = #tpu.pipeline_mode<synchronous>, transform_indices = @transform_4, window_bounds = array<i64: 1, 128>}, {transform_indices = @transform_5, window_bounds = array<i64: 8, 128>}]} {
    %c0_i32 = arith.constant 0 : i32
    %0 = arith.cmpi eq, %arg1, %c0_i32 : i32
    %1 = arith.extui %0 : i1 to i32
    %c0_i32_0 = arith.constant 0 : i32
    %2 = arith.cmpi ne, %1, %c0_i32_0 : i32
    scf.if %2 {
      %cst_9 = arith.constant 0.000000e+00 : f32
      %13 = vector.broadcast %cst_9 : f32 to vector<8x128xf32>
      %c0_10 = arith.constant 0 : index
      %c0_11 = arith.constant 0 : index
      %14 = vector.load %arg8[%c0_10, %c0_11] : memref<8x128xf32, #tpu.memory_space<vmem>>, vector<8x128xf32>
      tpu.vector_store %arg8[%c0_10, %c0_11], %13 {strides = array<i32>} : memref<8x128xf32, #tpu.memory_space<vmem>>, vector<8x128xf32>,
    } else {
    }
    %c0 = arith.constant 0 : index
    %c0_1 = arith.constant 0 : index
    %3 = vector.load %arg8[%c0, %c0_1] : memref<8x128xf32, #tpu.memory_space<vmem>>, vector<8x128xf32>
    %c0_2 = arith.constant 0 : index
    %c0_3 = arith.constant 0 : index
    %4 = vector.load %arg2[%c0_2, %c0_3] : memref<8x512xf32, #tpu.memory_space<vmem>>, vector<8x512xf32>
    %5 = arith.truncf %4 : vector<8x512xf32> to vector<8x512xbf16>
    %c0_4 = arith.constant 0 : index
    %c0_5 = arith.constant 0 : index
    %6 = vector.load %arg3[%c0_4, %c0_5] : memref<512x128xbf16, #tpu.memory_space<vmem>>, vector<512x128xbf16>
    %cst = arith.constant dense<0.000000e+00> : vector<8x128xf32>
    %7 = tpu.matmul %5, %6, %cst {dimension_numbers = #tpu.dot_dimension_numbers<[1], [0], [0], [1], [0, 0, 1, 1], [], []>} : vector<8x512xbf16>, vector<512x128xbf16>, vector<8x128xf32> -> vector<8x128xf32>
    %8 = arith.addf %3, %7 : vector<8x128xf32>
    %c0_6 = arith.constant 0 : index
    %c0_7 = arith.constant 0 : index
    %9 = vector.load %arg8[%c0_6, %c0_7] : memref<8x128xf32, #tpu.memory_space<vmem>>, vector<8x128xf32>
    tpu.vector_store %arg8[%c0_6, %c0_7], %8 {strides = array<i32>} : memref<8x128xf32, #tpu.memory_space<vmem>>, vector<8x128xf32>,
    %c1_i32 = arith.constant 1 : i32
    %10 = arith.cmpi eq, %arg1, %c1_i32 : i32
    %11 = arith.extui %10 : i1 to i32
    %c0_i32_8 = arith.constant 0 : i32
    %12 = arith.cmpi ne, %11, %c0_i32_8 : i32
    scf.if %12 {
      %c0_9 = arith.constant 0 : index
      %c0_10 = arith.constant 0 : index
      %13 = vector.load %arg8[%c0_9, %c0_10] : memref<8x128xf32, #tpu.memory_space<vmem>>, vector<8x128xf32>
      %c0_11 = arith.constant 0 : index
      %c0_12 = arith.constant 0 : index
      %14 = vector.load %arg4[%c0_11, %c0_12] : memref<1x128xf32, #tpu.memory_space<vmem>>, vector<1x128xf32>
      %15 = vector.broadcast %14 : vector<1x128xf32> to vector<8x128xf32>
      %16 = arith.addf %13, %15 : vector<8x128xf32>
      %cst_13 = arith.constant 0.000000e+00 : f32
      %17 = vector.broadcast %cst_13 : f32 to vector<8x128xf32>
      %18 = arith.maximumf %16, %17 : vector<8x128xf32>
      %19 = arith.truncf %18 : vector<8x128xf32> to vector<8x128xbf16>
      %c0_14 = arith.constant 0 : index
      %c0_15 = arith.constant 0 : index
      %20 = vector.load %arg5[%c0_14, %c0_15] : memref<128x128xbf16, #tpu.memory_space<vmem>>, vector<128x128xbf16>
      %cst_16 = arith.constant dense<0.000000e+00> : vector<8x128xf32>
      %21 = tpu.matmul %19, %20, %cst_16 {dimension_numbers = #tpu.dot_dimension_numbers<[1], [0], [0], [1], [0, 0, 1, 1], [], []>} : vector<8x128xbf16>, vector<128x128xbf16>, vector<8x128xf32> -> vector<8x128xf32>
      %c0_17 = arith.constant 0 : index
      %c0_18 = arith.constant 0 : index
      %22 = vector.load %arg6[%c0_17, %c0_18] : memref<1x128xf32, #tpu.memory_space<vmem>>, vector<1x128xf32>
      %23 = vector.broadcast %22 : vector<1x128xf32> to vector<8x128xf32>
      %24 = arith.addf %21, %23 : vector<8x128xf32>
      %c0_19 = arith.constant 0 : index
      %c0_20 = arith.constant 0 : index
      %25 = vector.load %arg7[%c0_19, %c0_20] : memref<8x128xf32, #tpu.memory_space<vmem>>, vector<8x128xf32>
      tpu.vector_store %arg7[%c0_19, %c0_20], %24 {strides = array<i32>} : memref<8x128xf32, #tpu.memory_space<vmem>>, vector<8x128xf32>,
    } else {
    }
    return
  }
  func.func @transform_0(%arg0: i32, %arg1: i32) -> (i32, i32) {
    %c0_i32 = arith.constant 0 : i32
    return %arg0, %arg1 : i32, i32
  }
  func.func @transform_1(%arg0: i32, %arg1: i32) -> (i32, i32) {
    %c0_i32 = arith.constant 0 : i32
    %c0_i32_0 = arith.constant 0 : i32
    return %arg1, %c0_i32 : i32, i32
  }
  func.func @transform_2(%arg0: i32, %arg1: i32) -> (i32, i32) {
    %c0_i32 = arith.constant 0 : i32
    %c0_i32_0 = arith.constant 0 : i32
    %c0_i32_1 = arith.constant 0 : i32
    return %c0_i32, %c0_i32_0 : i32, i32
  }
  func.func @transform_3(%arg0: i32, %arg1: i32) -> (i32, i32) {
    %c0_i32 = arith.constant 0 : i32
    %c0_i32_0 = arith.constant 0 : i32
    %c0_i32_1 = arith.constant 0 : i32
    return %c0_i32, %c0_i32_0 : i32, i32
  }
  func.func @transform_4(%arg0: i32, %arg1: i32) -> (i32, i32) {
    %c0_i32 = arith.constant 0 : i32
    %c0_i32_0 = arith.constant 0 : i32
    %c0_i32_1 = arith.constant 0 : i32
    return %c0_i32, %c0_i32_0 : i32, i32
  }
  func.func @transform_5(%arg0: i32, %arg1: i32) -> (i32, i32) {
    %c0_i32 = arith.constant 0 : i32
    %c0_i32_0 = arith.constant 0 : i32
    return %arg0, %c0_i32 : i32, i32
  }
}

</mosaic_0001>

<llo_original>
// kernel: _moe_forward_jit.1
$region0: #{_moe_forward_jit.1}
  #allocation0 [shape = 'u32[]', space=smem, size = 0x4, offset = 0x4, fixed_abs, tag = 'smem constant byte address 0x4 - core index']
  #allocation1 [shape = 'u32[144,128]{1,0:T(1,128)}', space=vmem, size = 0x12000, scoped, tag = 'internal scratch']
  #allocation2 [shape = 'f32[8,128]{1,0:T(8,128)}', space=vmem, size = 0x1000, scoped, tag = 'scratch operand']
  %s0 = inlined_call_operand.hbm [shape: f32[8,1024], index: 0, kind: input, shape index: {}]
  %s1 = inlined_call_operand.hbm [shape: bf16[1024,128], index: 1, kind: input, shape index: {}]
  %s2 = inlined_call_operand.vmem [shape: f32[1,128], index: 2, kind: input, shape index: {}]
  %s3 = inlined_call_operand.hbm [shape: bf16[128,128], index: 3, kind: input, shape index: {}]
  %s4 = inlined_call_operand.vmem [shape: f32[1,128], index: 4, kind: input, shape index: {}]
  %s5 = inlined_call_operand.hbm [shape: f32[8,128], index: 5, kind: output, shape index: {}]
  %s6 = sld [smem:[#allocation0]]
  $region73: #{_moe_forward_jit.1} parent=0
    _
  %s8 = ssub.s32 1, %s6
  %s9 = scalar_select 0, %s8, %s6
  $region1: #{_moe_forward_jit.1} parent=0
    #allocation3 [shape = 'u8[32768]{0}', space=vmem, size = 0x8000, scoped, tag = 'input window, operand 0']
    #allocation4 [shape = 's32[2]{0}', space=sflag, size = 0x8, scoped, tag = 'scoped memory for _moe_forward_jit.1']
    #allocation5 [shape = 's32[2]{0}', space=sflag, size = 0x8, scoped, tag = 'scoped memory for _moe_forward_jit.1']
    #allocation6 [shape = 'u8[262144]{0}', space=vmem, size = 0x40000, scoped, tag = 'input window, operand 1']
    #allocation7 [shape = 's32[2]{0}', space=sflag, size = 0x8, scoped, tag = 'scoped memory for _moe_forward_jit.1']
    #allocation8 [shape = 'u8[32768]{0}', space=vmem, size = 0x8000, scoped, tag = 'input window, operand 3, single buffered']
    #allocation9 [shape = 'u8[4096]{0}', space=vmem, size = 0x1000, scoped, tag = 'output window, operand 0, single buffered']
    %10 = vsyncpa [#allocation4], 0
    %s11 = scalar_lea.sflag [#allocation4], 1
    %12 = vsyncpa %s11, 0
    %13 = vsyncpa [#allocation7], 0
    %s14 = scalar_lea.sflag [#allocation7], 1
    %15 = vsyncpa %s14, 0
    %16 = vsyncpa [#allocation5], 0
    loop: start=0, step=1, limit=4
    $region2: #{_moe_forward_jit.1} parent=1 // loop_pre_header
      _
    $region3: #{_moe_forward_jit.1} parent=1 // loop_header
      %s18 = sphi 0, %s22
      %p19 = scmp.ge.s32.totalorder %s18, 4
      %s25 = sphi 0, %s37
      %s26 = sphi 0, %s33
      %s27 = sphi 0, %s25
      %s28 = sphi 0, %s26
      %s29 = sphi 0, %s27
      %s30 = sphi 0, %s28
      %s42 = sphi 0, %s44
      %s45 = sphi 0, %s42
      %s46 = sphi 0, %s45
      %s62 = sphi 0, %s46
      %s68 = sphi 0, %s70
      %s71 = sphi 0, %s68
      %s72 = sphi 0, %s71
      %s88 = sphi 0, %s72
      %s92 = sphi 0, %s92
      %s94 = sphi 0, %s92
      %s95 = sphi 0, %s94
      %s109 = sphi 0, %s95
      %s113 = sphi 0, %s113
      %s115 = sphi 0, %s113
      %s116 = sphi 0, %s115
      %s130 = sphi 0, %s116
      %s134 = sphi 0, %s134
      %s136 = sphi 0, %s134
      %s137 = sphi 0, %s136
      %s151 = sphi 0, %s137
      %s157 = sphi 0, %s159
      %s160 = sphi 0, %s157
      %s161 = sphi 0, %s160
      %s177 = sphi 0, %s161
    $region4: #{_moe_forward_jit.1} parent=1 // loop_header_branch
      %21 = sbr.rel (%p19) target = $region8
    $region5: #{_moe_forward_jit.1} parent=1 // loop_body
      %s23 = ssub.s32 %s18, 1
      %s24 = ssub.s32 %s18, 2
      %s31 = sadd.s32 1, %s26
      %p32 = scmp.ge.s32.totalorder %s31, 2
      %s33 = scalar_select %p32, 0, %s31
      %s34 = sadd.s32 1, %s25
      %s35 = scalar_select %p32, %s34, %s25
      %p36 = scmp.ge.s32.totalorder %s35, 1
      %s37 = scalar_select %p36, 0, %s35
      %s38 = ssub.s32 %s25, %s37
      %s39 = ssub.s32 %s26, %s33
      %s40 = sor.u32 %s38, %s39
      %p41 = scmp.eq.s32.totalorder %s40, 0
      %s43 = sadd.s32 %s42, 1
      %s44 = scalar_select %p41, %s42, %s43
      %p47 = pneg %p41
      %p48 = scmp.eq.s32.totalorder %s18, 1
      %p49 = por %p47, %p48
      %p50 = scmp.ne.s32.totalorder %s42, %s45
      %p51 = scmp.eq.s32.totalorder %s18, 0
      %p52 = por %p50, %p51
      %p53 = scmp.ne.s32.totalorder %s42, %s45
      %p54 = scmp.eq.s32.totalorder %s23, 1
      %p55 = por %p53, %p54
      %p56 = scmp.ne.s32.totalorder %s45, %s46
      %p57 = scmp.eq.s32.totalorder %s23, 0
      %p58 = por %p56, %p57
      %p59 = scmp.ne.s32.totalorder %s45, %s46
      %p60 = scmp.eq.s32.totalorder %s24, 1
      %p61 = por %p59, %p60
      %p63 = scmp.ne.s32.totalorder %s46, %s62
      %p64 = scmp.eq.s32.totalorder %s24, 0
      %p65 = por %p63, %p64
      %s66 = ssub.s32 %s26, %s33
      %p67 = scmp.eq.s32.totalorder %s66, 0
      %s69 = sadd.s32 %s68, 1
      %s70 = scalar_select %p67, %s68, %s69
      %p73 = pneg %p67
      %p74 = scmp.eq.s32.totalorder %s18, 1
      %p75 = por %p73, %p74
      %p76 = scmp.ne.s32.totalorder %s68, %s71
      %p77 = scmp.eq.s32.totalorder %s18, 0
      %p78 = por %p76, %p77
      %p79 = scmp.ne.s32.totalorder %s68, %s71
      %p80 = scmp.eq.s32.totalorder %s23, 1
      %p81 = por %p79, %p80
      %p82 = scmp.ne.s32.totalorder %s71, %s72
      %p83 = scmp.eq.s32.totalorder %s23, 0
      %p84 = por %p82, %p83
      %p85 = scmp.ne.s32.totalorder %s71, %s72
      %p86 = scmp.eq.s32.totalorder %s24, 1
      %p87 = por %p85, %p86
      %p89 = scmp.ne.s32.totalorder %s72, %s88
      %p90 = scmp.eq.s32.totalorder %s24, 0
      %p91 = por %p89, %p90
      %s93 = sadd.s32 %s92, 1
      %p96 = scmp.eq.s32.totalorder %s18, 1
      %p97 = scmp.ne.s32.totalorder %s92, %s94
      %p98 = scmp.eq.s32.totalorder %s18, 0
      %p99 = por %p97, %p98
      %p100 = scmp.ne.s32.totalorder %s92, %s94
      %p101 = scmp.eq.s32.totalorder %s23, 1
      %p102 = por %p100, %p101
      %p103 = scmp.ne.s32.totalorder %s94, %s95
      %p104 = scmp.eq.s32.totalorder %s23, 0
      %p105 = por %p103, %p104
      %p106 = scmp.ne.s32.totalorder %s94, %s95
      %p107 = scmp.eq.s32.totalorder %s24, 1
      %p108 = por %p106, %p107
      %p110 = scmp.ne.s32.totalorder %s95, %s109
      %p111 = scmp.eq.s32.totalorder %s24, 0
      %p112 = por %p110, %p111
      %s114 = sadd.s32 %s113, 1
      %p117 = scmp.eq.s32.totalorder %s18, 1
      %p118 = scmp.ne.s32.totalorder %s113, %s115
      %p119 = scmp.eq.s32.totalorder %s18, 0
      %p120 = por %p118, %p119
      %p121 = scmp.ne.s32.totalorder %s113, %s115
      %p122 = scmp.eq.s32.totalorder %s23, 1
      %p123 = por %p121, %p122
      %p124 = scmp.ne.s32.totalorder %s115, %s116
      %p125 = scmp.eq.s32.totalorder %s23, 0
      %p126 = por %p124, %p125
      %p127 = scmp.ne.s32.totalorder %s115, %s116
      %p128 = scmp.eq.s32.totalorder %s24, 1
      %p129 = por %p127, %p128
      %p131 = scmp.ne.s32.totalorder %s116, %s130
      %p132 = scmp.eq.s32.totalorder %s24, 0
      %p133 = por %p131, %p132
      %s135 = sadd.s32 %s134, 1
      %p138 = scmp.eq.s32.totalorder %s18, 1
      %p139 = scmp.ne.s32.totalorder %s134, %s136
      %p140 = scmp.eq.s32.totalorder %s18, 0
      %p141 = por %p139, %p140
      %p142 = scmp.ne.s32.totalorder %s134, %s136
      %p143 = scmp.eq.s32.totalorder %s23, 1
      %p144 = por %p142, %p143
      %p145 = scmp.ne.s32.totalorder %s136, %s137
      %p146 = scmp.eq.s32.totalorder %s23, 0
      %p147 = por %p145, %p146
      %p148 = scmp.ne.s32.totalorder %s136, %s137
      %p149 = scmp.eq.s32.totalorder %s24, 1
      %p150 = por %p148, %p149
      %p152 = scmp.ne.s32.totalorder %s137, %s151
      %p153 = scmp.eq.s32.totalorder %s24, 0
      %p154 = por %p152, %p153
      %s155 = ssub.s32 %s25, %s37
      %p156 = scmp.eq.s32.totalorder %s155, 0
      %s158 = sadd.s32 %s157, 1
      %s159 = scalar_select %p156, %s157, %s158
      %p162 = pneg %p156
      %p163 = scmp.eq.s32.totalorder %s18, 1
      %p164 = por %p162, %p163
      %p165 = scmp.ne.s32.totalorder %s157, %s160
      %p166 = scmp.eq.s32.totalorder %s18, 0
      %p167 = por %p165, %p166
      %p168 = scmp.ne.s32.totalorder %s157, %s160
      %p169 = scmp.eq.s32.totalorder %s23, 1
      %p170 = por %p168, %p169
      %p171 = scmp.ne.s32.totalorder %s160, %s161
      %p172 = scmp.eq.s32.totalorder %s23, 0
      %p173 = por %p171, %p172
      %p174 = scmp.ne.s32.totalorder %s160, %s161
      %p175 = scmp.eq.s32.totalorder %s24, 1
      %p176 = por %p174, %p175
      %p178 = scmp.ne.s32.totalorder %s161, %s177
      %p179 = scmp.eq.s32.totalorder %s24, 0
      %p180 = por %p178, %p179
      %p181 = scmp.le.s32.totalorder 1, %s18
      %p182 = scmp.lt.s32.totalorder %s18, 3
      %p183 = pnand %p181, %p182
      %p184 = pneg %p183
      // Predicated region
      $region9: #{_moe_forward_jit.1} parent=5 // pred_check
        _
      $region10: #{_moe_forward_jit.1} parent=5 // pred_check_branch
        %186 = sbr.rel (%p183) target = $region12
      $region11: #{_moe_forward_jit.1} parent=5 // pred_region
        %s187 = ssub.s32 %s18, 1
        // Predicated region
        $region13: #{_moe_forward_jit.1} parent=11 // pred_check
          %p188 = pneg %p105
        $region14: #{_moe_forward_jit.1} parent=11 // pred_check_branch
          %190 = sbr.rel (%p188) target = $region16
        $region15: #{_moe_forward_jit.1} parent=11 // pred_region
          _
        $region16: #{_moe_forward_jit.1} parent=11 // pred_fallthru
          _
        // Predicated region
        $region17: #{_moe_forward_jit.1} parent=11 // pred_check
          %p191 = pneg %p126
        $region18: #{_moe_forward_jit.1} parent=11 // pred_check_branch
          %193 = sbr.rel (%p191) target = $region20
        $region19: #{_moe_forward_jit.1} parent=11 // pred_region
          %s195 = ssub.s32 1024, 1024
          %196 = vsyncadd [#allocation7], %s195
          %s197 = sshll.u32 [#allocation8], 4
          %s198 = int_to_ptr.vmem [resolvable:$true] %s197
          %203 = dma.hbm_to_vmem [thread:$0]  %s3, 1024, %s198, [#allocation7], 64, 64, 4
        $region20: #{_moe_forward_jit.1} parent=11 // pred_fallthru
          _
        // Predicated region
        $region21: #{_moe_forward_jit.1} parent=11 // pred_check
          %p204 = pneg %p147
        $region22: #{_moe_forward_jit.1} parent=11 // pred_check_branch
          %206 = sbr.rel (%p204) target = $region24
        $region23: #{_moe_forward_jit.1} parent=11 // pred_region
          _
        $region24: #{_moe_forward_jit.1} parent=11 // pred_fallthru
          _
      $region12: #{_moe_forward_jit.1} parent=5 // pred_fallthru
        _
      %p207 = scmp.lt.s32.totalorder %s18, 2
      // Predicated region
      $region25: #{_moe_forward_jit.1} parent=5 // pred_check
        %p208 = pneg %p207
      $region26: #{_moe_forward_jit.1} parent=5 // pred_check_branch
        %210 = sbr.rel (%p208) target = $region28
      $region27: #{_moe_forward_jit.1} parent=5 // pred_region
        // Predicated region
        $region29: #{_moe_forward_jit.1} parent=27 // pred_check
          %p211 = pneg %p52
        $region30: #{_moe_forward_jit.1} parent=27 // pred_check_branch
          %213 = sbr.rel (%p211) target = $region32
        $region31: #{_moe_forward_jit.1} parent=27 // pred_region
          %s214 = sand.u32 %s42, 1
          %s215 = scalar_lea.sflag [#allocation4], %s214
          %s216 = sand.u32 %s42, 1
          %s217 = smul.addr %s216, 32
          %s218 = scalar_lea.vmem [#allocation3], %s217
          %s219 = smul.u32 4, %s26
          %s221 = ssub.s32 512, 512
          %222 = vsyncadd %s215, %s221
          %s223 = smul.addr %s25, 8
          %s224 = sadd.s32 %s219, %s223
          %s225 = smul.addr %s224, 128
          %s226 = scalar_lea.hbm %s0, %s225
          %s228 = sshll.u32 %s218, 4
          %s229 = int_to_ptr.vmem [resolvable:$true] %s228
          %231 = dma.hbm_to_vmem [thread:$0]  %s226, 512, %s229, %s215
        $region32: #{_moe_forward_jit.1} parent=27 // pred_fallthru
          _
        // Predicated region
        $region33: #{_moe_forward_jit.1} parent=27 // pred_check
          %p232 = pneg %p78
        $region34: #{_moe_forward_jit.1} parent=27 // pred_check_branch
          %234 = sbr.rel (%p232) target = $region36
        $region35: #{_moe_forward_jit.1} parent=27 // pred_region
          %s235 = sand.u32 %s18, 1
          %s236 = scalar_lea.sflag [#allocation7], %s235
          %s237 = sand.u32 %s68, 1
          %s238 = smul.addr %s237, 256
          %s239 = scalar_lea.vmem [#allocation6], %s238
          %s240 = smul.u32 64, %s26
          %s242 = ssub.s32 4096, 4096
          %243 = vsyncadd %s236, %s242
          %s244 = smul.addr %s240, 64
          %s245 = scalar_lea.hbm %s1, %s244
          %s246 = sshll.u32 %s239, 4
          %s247 = int_to_ptr.vmem [resolvable:$true] %s246
          %252 = dma.hbm_to_vmem [thread:$0]  %s245, 4096, %s247, %s236, 64, 64, 4
        $region36: #{_moe_forward_jit.1} parent=27 // pred_fallthru
          _
      $region28: #{_moe_forward_jit.1} parent=5 // pred_fallthru
        _
      %p253 = scmp.le.s32.totalorder 1, %s18
      %p254 = scmp.lt.s32.totalorder %s18, 3
      %p255 = pnand %p253, %p254
      %p256 = pneg %p255
      // Predicated region
      $region37: #{_moe_forward_jit.1} parent=5 // pred_check
        _
      $region38: #{_moe_forward_jit.1} parent=5 // pred_check_branch
        %258 = sbr.rel (%p255) target = $region40
      $region39: #{_moe_forward_jit.1} parent=5 // pred_region
        %s259 = ssub.s32 %s18, 1
        %s260 = sand.u32 %s45, 1
        %s261 = scalar_lea.sflag [#allocation4], %s260
        %s262 = sand.u32 %s45, 1
        %s263 = smul.addr %s262, 32
        %s264 = scalar_lea.vmem [#allocation3], %s263
        // Predicated region
        $region41: #{_moe_forward_jit.1} parent=39 // pred_check
          %p265 = pneg %p58
        $region42: #{_moe_forward_jit.1} parent=39 // pred_check_branch
          %267 = sbr.rel (%p265) target = $region44
        $region43: #{_moe_forward_jit.1} parent=39 // pred_region
          %268 = dma.done %s261, 512
        $region44: #{_moe_forward_jit.1} parent=39 // pred_fallthru
          _
        %s269 = sand.u32 %s23, 1
        %s270 = scalar_lea.sflag [#allocation7], %s269
        %s271 = sand.u32 %s71, 1
        %s272 = smul.addr %s271, 256
        %s273 = scalar_lea.vmem [#allocation6], %s272
        // Predicated region
        $region45: #{_moe_forward_jit.1} parent=39 // pred_check
          %p274 = pneg %p84
        $region46: #{_moe_forward_jit.1} parent=39 // pred_check_branch
          %276 = sbr.rel (%p274) target = $region48
        $region47: #{_moe_forward_jit.1} parent=39 // pred_region
          %277 = dma.done %s270, 4096
        $region48: #{_moe_forward_jit.1} parent=39 // pred_fallthru
          _
        // Predicated region
        $region49: #{_moe_forward_jit.1} parent=39 // pred_check
          %p278 = pneg %p126
        $region50: #{_moe_forward_jit.1} parent=39 // pred_check_branch
          %280 = sbr.rel (%p278) target = $region52
        $region51: #{_moe_forward_jit.1} parent=39 // pred_region
          %281 = dma.done [#allocation7], 1024
        $region52: #{_moe_forward_jit.1} parent=39 // pred_fallthru
          _
        %s282 = sand.u32 %s45, 1
        %s283 = scalar_lea.sflag [#allocation4], %s282
        %s284 = sand.u32 %s45, 1
        %s285 = smul.addr %s284, 32
        %s286 = scalar_lea.vmem [#allocation3], %s285
        %p287 = pneg %p58
        %p288 = pneg %p55
        %s289 = sand.u32 %s23, 1
        %s290 = scalar_lea.sflag [#allocation7], %s289
        %s291 = sand.u32 %s71, 1
        %s292 = smul.addr %s291, 256
        %s293 = scalar_lea.vmem [#allocation6], %s292
        %p294 = pneg %p84
        %p295 = pneg %p81
        %p296 = pneg %p105
        %p297 = pneg %p102
        %p298 = pneg %p126
        %p299 = pneg %p123
        %p300 = pneg %p147
        %p301 = pneg %p144
        %p302 = pneg %p173
        %p303 = pneg %p170
        %s304 = smul.u32 4, %s28
        %s305 = smul.u32 64, %s28
        %p307 = scmp.eq.s32.totalorder %s28, 0
        // Predicated region
        $region53: #{_moe_forward_jit.1} parent=39 // pred_check
          %p308 = pneg %p307
        $region54: #{_moe_forward_jit.1} parent=39 // pred_check_branch
          %310 = sbr.rel (%p308) target = $region56
        $region55: #{_moe_forward_jit.1} parent=39 // pred_region
          %311 = vst [vmem:[#allocation2] sm:$0xff] 0.0
        $region56: #{_moe_forward_jit.1} parent=39 // pred_fallthru
          _
        %v312 = vld [vmem:[#allocation2] sm:$0xff]
        %v313 = vld [vmem:[%s264] sm:$0xff]
        %v314 = vld [vmem:[%s264 + $0x8] sm:$0xff]
        %v315 = vld [vmem:[%s264 + $0x10] sm:$0xff]
        %v316 = vld [vmem:[%s264 + $0x18] sm:$0xff]
        %v317 = vpack.c.bf16 %v313, %v313
        %v318 = vpack.c.bf16 %v314, %v314
        %v319 = vpack.c.bf16 %v315, %v315
        %v320 = vpack.c.bf16 %v316, %v316
        %v321 = vld [vmem:[%s273] sm:$0xf]
        %v322 = vld [vmem:[%s273 + $0x4] sm:$0xf]
        %v323 = vld [vmem:[%s273 + $0x8] sm:$0xf]
        %v324 = vld [vmem:[%s273 + $0xc] sm:$0xf]
        %v325 = vld [vmem:[%s273 + $0x10] sm:$0xf]
        %v326 = vld [vmem:[%s273 + $0x14] sm:$0xf]
        %v327 = vld [vmem:[%s273 + $0x18] sm:$0xf]
        %v328 = vld [vmem:[%s273 + $0x1c] sm:$0xf]
        %v329 = vld [vmem:[%s273 + $0x20] sm:$0xf]
        %v330 = vld [vmem:[%s273 + $0x24] sm:$0xf]
        %v331 = vld [vmem:[%s273 + $0x28] sm:$0xf]
        %v332 = vld [vmem:[%s273 + $0x2c] sm:$0xf]
        %v333 = vld [vmem:[%s273 + $0x30] sm:$0xf]
        %v334 = vld [vmem:[%s273 + $0x34] sm:$0xf]
        %v335 = vld [vmem:[%s273 + $0x38] sm:$0xf]
        %v336 = vld [vmem:[%s273 + $0x3c] sm:$0xf]
        %v337 = vld [vmem:[%s273 + $0x40] sm:$0xf]
        %v338 = vld [vmem:[%s273 + $0x44] sm:$0xf]
        %v339 = vld [vmem:[%s273 + $0x48] sm:$0xf]
        %v340 = vld [vmem:[%s273 + $0x4c] sm:$0xf]
        %v341 = vld [vmem:[%s273 + $0x50] sm:$0xf]
        %v342 = vld [vmem:[%s273 + $0x54] sm:$0xf]
        %v343 = vld [vmem:[%s273 + $0x58] sm:$0xf]
        %v344 = vld [vmem:[%s273 + $0x5c] sm:$0xf]
        %v345 = vld [vmem:[%s273 + $0x60] sm:$0xf]
        %v346 = vld [vmem:[%s273 + $0x64] sm:$0xf]
        %v347 = vld [vmem:[%s273 + $0x68] sm:$0xf]
        %v348 = vld [vmem:[%s273 + $0x6c] sm:$0xf]
        %v349 = vld [vmem:[%s273 + $0x70] sm:$0xf]
        %v350 = vld [vmem:[%s273 + $0x74] sm:$0xf]
        %v351 = vld [vmem:[%s273 + $0x78] sm:$0xf]
        %v352 = vld [vmem:[%s273 + $0x7c] sm:$0xf]
        %v353 = vld [vmem:[%s273 + $0x80] sm:$0xf]
        %v354 = vld [vmem:[%s273 + $0x84] sm:$0xf]
        %v355 = vld [vmem:[%s273 + $0x88] sm:$0xf]
        %v356 = vld [vmem:[%s273 + $0x8c] sm:$0xf]
        %v357 = vld [vmem:[%s273 + $0x90] sm:$0xf]
        %v358 = vld [vmem:[%s273 + $0x94] sm:$0xf]
        %v359 = vld [vmem:[%s273 + $0x98] sm:$0xf]
        %v360 = vld [vmem:[%s273 + $0x9c] sm:$0xf]
        %v361 = vld [vmem:[%s273 + $0xa0] sm:$0xf]
        %v362 = vld [vmem:[%s273 + $0xa4] sm:$0xf]
        %v363 = vld [vmem:[%s273 + $0xa8] sm:$0xf]
        %v364 = vld [vmem:[%s273 + $0xac] sm:$0xf]
        %v365 = vld [vmem:[%s273 + $0xb0] sm:$0xf]
        %v366 = vld [vmem:[%s273 + $0xb4] sm:$0xf]
        %v367 = vld [vmem:[%s273 + $0xb8] sm:$0xf]
        %v368 = vld [vmem:[%s273 + $0xbc] sm:$0xf]
        %v369 = vld [vmem:[%s273 + $0xc0] sm:$0xf]
        %v370 = vld [vmem:[%s273 + $0xc4] sm:$0xf]
        %v371 = vld [vmem:[%s273 + $0xc8] sm:$0xf]
        %v372 = vld [vmem:[%s273 + $0xcc] sm:$0xf]
        %v373 = vld [vmem:[%s273 + $0xd0] sm:$0xf]
        %v374 = vld [vmem:[%s273 + $0xd4] sm:$0xf]
        %v375 = vld [vmem:[%s273 + $0xd8] sm:$0xf]
        %v376 = vld [vmem:[%s273 + $0xdc] sm:$0xf]
        %v377 = vld [vmem:[%s273 + $0xe0] sm:$0xf]
        %v378 = vld [vmem:[%s273 + $0xe4] sm:$0xf]
        %v379 = vld [vmem:[%s273 + $0xe8] sm:$0xf]
        %v380 = vld [vmem:[%s273 + $0xec] sm:$0xf]
        %v381 = vld [vmem:[%s273 + $0xf0] sm:$0xf]
        %v382 = vld [vmem:[%s273 + $0xf4] sm:$0xf]
        %v383 = vld [vmem:[%s273 + $0xf8] sm:$0xf]
        %v384 = vld [vmem:[%s273 + $0xfc] sm:$0xf]
        %v449 = vunpack.c.l.b16 %v321
        %v450 = vunpack.c.l.b16 %v322
        %v451 = vunpack.c.l.b16 %v323
        %v452 = vunpack.c.l.b16 %v324
        %v453 = vunpack.c.l.b16 %v325
        %v454 = vunpack.c.l.b16 %v326
        %v455 = vunpack.c.l.b16 %v327
        %v456 = vunpack.c.l.b16 %v328
        %v457 = vunpack.c.l.b16 %v329
        %v458 = vunpack.c.l.b16 %v330
        %v459 = vunpack.c.l.b16 %v331
        %v460 = vunpack.c.l.b16 %v332
        %v461 = vunpack.c.l.b16 %v333
        %v462 = vunpack.c.l.b16 %v334
        %v463 = vunpack.c.l.b16 %v335
        %v464 = vunpack.c.l.b16 %v336
        %v465 = vunpack.c.l.b16 %v337
        %v466 = vunpack.c.l.b16 %v338
        %v467 = vunpack.c.l.b16 %v339
        %v468 = vunpack.c.l.b16 %v340
        %v469 = vunpack.c.l.b16 %v341
        %v470 = vunpack.c.l.b16 %v342
        %v471 = vunpack.c.l.b16 %v343
        %v472 = vunpack.c.l.b16 %v344
        %v473 = vunpack.c.l.b16 %v345
        %v474 = vunpack.c.l.b16 %v346
        %v475 = vunpack.c.l.b16 %v347
        %v476 = vunpack.c.l.b16 %v348
        %v477 = vunpack.c.l.b16 %v349
        %v478 = vunpack.c.l.b16 %v350
        %v479 = vunpack.c.l.b16 %v351
        %v480 = vunpack.c.l.b16 %v352
        %v481 = vunpack.c.l.b16 %v353
        %v482 = vunpack.c.l.b16 %v354
        %v483 = vunpack.c.l.b16 %v355
        %v484 = vunpack.c.l.b16 %v356
        %v485 = vunpack.c.l.b16 %v357
        %v486 = vunpack.c.l.b16 %v358
        %v487 = vunpack.c.l.b16 %v359
        %v488 = vunpack.c.l.b16 %v360
        %v489 = vunpack.c.l.b16 %v361
        %v490 = vunpack.c.l.b16 %v362
        %v491 = vunpack.c.l.b16 %v363
        %v492 = vunpack.c.l.b16 %v364
        %v493 = vunpack.c.l.b16 %v365
        %v494 = vunpack.c.l.b16 %v366
        %v495 = vunpack.c.l.b16 %v367
        %v496 = vunpack.c.l.b16 %v368
        %v497 = vunpack.c.l.b16 %v369
        %v498 = vunpack.c.l.b16 %v370
        %v499 = vunpack.c.l.b16 %v371
        %v500 = vunpack.c.l.b16 %v372
        %v501 = vunpack.c.l.b16 %v373
        %v502 = vunpack.c.l.b16 %v374
        %v503 = vunpack.c.l.b16 %v375
        %v504 = vunpack.c.l.b16 %v376
        %v505 = vunpack.c.l.b16 %v377
        %v506 = vunpack.c.l.b16 %v378
        %v507 = vunpack.c.l.b16 %v379
        %v508 = vunpack.c.l.b16 %v380
        %v509 = vunpack.c.l.b16 %v381
        %v510 = vunpack.c.l.b16 %v382
        %v511 = vunpack.c.l.b16 %v383
        %v512 = vunpack.c.l.b16 %v384
        %v513 = vpack.c.b16 %v450, %v449
        %v514 = vpack.c.b16 %v452, %v451
        %v515 = vpack.c.b16 %v454, %v453
        %v516 = vpack.c.b16 %v456, %v455
        %v517 = vpack.c.b16 %v458, %v457
        %v518 = vpack.c.b16 %v460, %v459
        %v519 = vpack.c.b16 %v462, %v461
        %v520 = vpack.c.b16 %v464, %v463
        %v521 = vpack.c.b16 %v466, %v465
        %v522 = vpack.c.b16 %v468, %v467
        %v523 = vpack.c.b16 %v470, %v469
        %v524 = vpack.c.b16 %v472, %v471
        %v525 = vpack.c.b16 %v474, %v473
        %v526 = vpack.c.b16 %v476, %v475
        %v527 = vpack.c.b16 %v478, %v477
        %v528 = vpack.c.b16 %v480, %v479
        %v529 = vpack.c.b16 %v482, %v481
        %v530 = vpack.c.b16 %v484, %v483
        %v531 = vpack.c.b16 %v486, %v485
        %v532 = vpack.c.b16 %v488, %v487
        %v533 = vpack.c.b16 %v490, %v489
        %v534 = vpack.c.b16 %v492, %v491
        %v535 = vpack.c.b16 %v494, %v493
        %v536 = vpack.c.b16 %v496, %v495
        %v537 = vpack.c.b16 %v498, %v497
        %v538 = vpack.c.b16 %v500, %v499
        %v539 = vpack.c.b16 %v502, %v501
        %v540 = vpack.c.b16 %v504, %v503
        %v541 = vpack.c.b16 %v506, %v505
        %v542 = vpack.c.b16 %v508, %v507
        %v543 = vpack.c.b16 %v510, %v509
        %v544 = vpack.c.b16 %v512, %v511
        %577 = vmatprep.subr.bf16.mxu0 0
        %578 = vmatpush1.bf16.msra.mxu0 %v513
        %579 = vmatprep.subr.bf16.mxu0 0
        %580 = vmatpush1.bf16.msra.mxu0 %v514
        %581 = vmatprep.subr.bf16.mxu0 0
        %582 = vmatpush1.bf16.msra.mxu0 %v515
        %583 = vmatprep.subr.bf16.mxu0 0
        %584 = vmatpush1.bf16.msra.mxu0 %v516
        %585 = vmatprep.subr.bf16.mxu0 0
        %586 = vmatpush1.bf16.msra.mxu0 %v517
        %587 = vmatprep.subr.bf16.mxu0 0
        %588 = vmatpush1.bf16.msra.mxu0 %v518
        %589 = vmatprep.subr.bf16.mxu0 0
        %590 = vmatpush1.bf16.msra.mxu0 %v519
        %591 = vmatprep.subr.bf16.mxu0 0
        %592 = vmatpush1.bf16.msra.mxu0 %v520
        %593 = vmatprep.subr.bf16.mxu0 0
        %594 = vmatpush1.bf16.msra.mxu0 %v521
        %595 = vmatprep.subr.bf16.mxu0 0
        %596 = vmatpush1.bf16.msra.mxu0 %v522
        %597 = vmatprep.subr.bf16.mxu0 0
        %598 = vmatpush1.bf16.msra.mxu0 %v523
        %599 = vmatprep.subr.bf16.mxu0 0
        %600 = vmatpush1.bf16.msra.mxu0 %v524
        %601 = vmatprep.subr.bf16.mxu0 0
        %602 = vmatpush1.bf16.msra.mxu0 %v525
        %603 = vmatprep.subr.bf16.mxu0 0
        %604 = vmatpush1.bf16.msra.mxu0 %v526
        %605 = vmatprep.subr.bf16.mxu0 0
        %606 = vmatpush1.bf16.msra.mxu0 %v527
        %607 = vmatprep.subr.bf16.mxu0 0
        %608 = vmatpush1.bf16.msra.mxu0 %v528
        %609 = vmatprep.mubr.bf16.mxu0 %v318
        %610 = vmatmul.mubr.bf16.gmra.mrb[0].mxu0 %v317
        %v611 = vpop.f32.mrb[0].mxu0
        %v612 = vadd.f32 0.0, %v611
        %v613 = vpop.f32.mrb[0].mxu0
        %v614 = vpop.f32.mrb[0].mxu0
        %v615 = vpop.f32.mrb[0].mxu0
        %616 = vdwg.mxu0
        %617 = vmatprep.subr.bf16.mxu0 0
        %618 = vmatpush1.bf16.msra.mxu0 %v529
        %619 = vmatprep.subr.bf16.mxu0 0
        %620 = vmatpush1.bf16.msra.mxu0 %v530
        %621 = vmatprep.subr.bf16.mxu0 0
        %622 = vmatpush1.bf16.msra.mxu0 %v531
        %623 = vmatprep.subr.bf16.mxu0 0
        %624 = vmatpush1.bf16.msra.mxu0 %v532
        %625 = vmatprep.subr.bf16.mxu0 0
        %626 = vmatpush1.bf16.msra.mxu0 %v533
        %627 = vmatprep.subr.bf16.mxu0 0
        %628 = vmatpush1.bf16.msra.mxu0 %v534
        %629 = vmatprep.subr.bf16.mxu0 0
        %630 = vmatpush1.bf16.msra.mxu0 %v535
        %631 = vmatprep.subr.bf16.mxu0 0
        %632 = vmatpush1.bf16.msra.mxu0 %v536
        %633 = vmatprep.subr.bf16.mxu0 0
        %634 = vmatpush1.bf16.msra.mxu0 %v537
        %635 = vmatprep.subr.bf16.mxu0 0
        %636 = vmatpush1.bf16.msra.mxu0 %v538
        %637 = vmatprep.subr.bf16.mxu0 0
        %638 = vmatpush1.bf16.msra.mxu0 %v539
        %639 = vmatprep.subr.bf16.mxu0 0
        %640 = vmatpush1.bf16.msra.mxu0 %v540
        %641 = vmatprep.subr.bf16.mxu0 0
        %642 = vmatpush1.bf16.msra.mxu0 %v541
        %643 = vmatprep.subr.bf16.mxu0 0
        %644 = vmatpush1.bf16.msra.mxu0 %v542
        %645 = vmatprep.subr.bf16.mxu0 0
        %646 = vmatpush1.bf16.msra.mxu0 %v543
        %647 = vmatprep.subr.bf16.mxu0 0
        %648 = vmatpush1.bf16.msra.mxu0 %v544
        %649 = vmatprep.mubr.bf16.mxu0 %v320
        %650 = vmatmul.mubr.bf16.gmra.mrb[0].mxu0 %v319
        %v651 = vpop.f32.mrb[0].mxu0
        %v652 = vadd.f32 %v612, %v651
        %v653 = vpop.f32.mrb[0].mxu0
        %v654 = vpop.f32.mrb[0].mxu0
        %v655 = vpop.f32.mrb[0].mxu0
        %656 = vdwg.mxu0
        %v657 = vadd.f32 %v312, %v652
        %658 = vst [vmem:[#allocation2] sm:$0xff] %v657
        %p659 = scmp.eq.s32.totalorder %s28, 1
        // Predicated region
        $region57: #{_moe_forward_jit.1} parent=39 // pred_check
          %p660 = pneg %p659
        $region58: #{_moe_forward_jit.1} parent=39 // pred_check_branch
          %662 = sbr.rel (%p660) target = $region60
        $region59: #{_moe_forward_jit.1} parent=39 // pred_region
          %v663 = vld [vmem:[#allocation2] sm:$0xff]
          %v664 = vld [vmem:[%s2] sm:$0x1]
          %v666 = vlaneseq
          %v667 = vshrl.u32 %v666, 7
          %v668 = vsub.s32 0, %v667
          %v669 = vrot.slane %v664, %v668
          %v671 = vadd.f32 %v663, %v669
          %v672 = vmax.f32 %v671, 0.0
          %v673 = vpack.c.bf16 %v672, %v672
          %v674 = vld [vmem:[#allocation8] sm:$0xf]
          %v675 = vld [vmem:[#allocation8 + $0x4] sm:$0xf]
          %v676 = vld [vmem:[#allocation8 + $0x8] sm:$0xf]
          %v677 = vld [vmem:[#allocation8 + $0xc] sm:$0xf]
          %v678 = vld [vmem:[#allocation8 + $0x10] sm:$0xf]
          %v679 = vld [vmem:[#allocation8 + $0x14] sm:$0xf]
          %v680 = vld [vmem:[#allocation8 + $0x18] sm:$0xf]
          %v681 = vld [vmem:[#allocation8 + $0x1c] sm:$0xf]
          %v682 = vld [vmem:[#allocation8 + $0x20] sm:$0xf]
          %v683 = vld [vmem:[#allocation8 + $0x24] sm:$0xf]
          %v684 = vld [vmem:[#allocation8 + $0x28] sm:$0xf]
          %v685 = vld [vmem:[#allocation8 + $0x2c] sm:$0xf]
          %v686 = vld [vmem:[#allocation8 + $0x30] sm:$0xf]
          %v687 = vld [vmem:[#allocation8 + $0x34] sm:$0xf]
          %v688 = vld [vmem:[#allocation8 + $0x38] sm:$0xf]
          %v689 = vld [vmem:[#allocation8 + $0x3c] sm:$0xf]
          %v690 = vld [vmem:[%s4] sm:$0x1]
          %v692 = vlaneseq
          %v693 = vshrl.u32 %v692, 7
          %v694 = vsub.s32 0, %v693
          %v695 = vrot.slane %v690, %v694
          %v713 = vunpack.c.l.b16 %v674
          %v714 = vunpack.c.l.b16 %v675
          %v715 = vunpack.c.l.b16 %v676
          %v716 = vunpack.c.l.b16 %v677
          %v717 = vunpack.c.l.b16 %v678
          %v718 = vunpack.c.l.b16 %v679
          %v719 = vunpack.c.l.b16 %v680
          %v720 = vunpack.c.l.b16 %v681
          %v721 = vunpack.c.l.b16 %v682
          %v722 = vunpack.c.l.b16 %v683
          %v723 = vunpack.c.l.b16 %v684
          %v724 = vunpack.c.l.b16 %v685
          %v725 = vunpack.c.l.b16 %v686
          %v726 = vunpack.c.l.b16 %v687
          %v727 = vunpack.c.l.b16 %v688
          %v728 = vunpack.c.l.b16 %v689
          %v729 = vpack.c.b16 %v714, %v713
          %v730 = vpack.c.b16 %v716, %v715
          %v731 = vpack.c.b16 %v718, %v717
          %v732 = vpack.c.b16 %v720, %v719
          %v733 = vpack.c.b16 %v722, %v721
          %v734 = vpack.c.b16 %v724, %v723
          %v735 = vpack.c.b16 %v726, %v725
          %v736 = vpack.c.b16 %v728, %v727
          %745 = vmatprep.subr.bf16.mxu0 0
          %746 = vmatpush1.bf16.msra.mxu0 %v729
          %747 = vmatprep.subr.bf16.mxu0 0
          %748 = vmatpush1.bf16.msra.mxu0 %v730
          %749 = vmatprep.subr.bf16.mxu0 0
          %750 = vmatpush1.bf16.msra.mxu0 %v731
          %751 = vmatprep.subr.bf16.mxu0 0
          %752 = vmatpush1.bf16.msra.mxu0 %v732
          %753 = vmatprep.subr.bf16.mxu0 0
          %754 = vmatpush1.bf16.msra.mxu0 %v733
          %755 = vmatprep.subr.bf16.mxu0 0
          %756 = vmatpush1.bf16.msra.mxu0 %v734
          %757 = vmatprep.subr.bf16.mxu0 0
          %758 = vmatpush1.bf16.msra.mxu0 %v735
          %759 = vmatprep.subr.bf16.mxu0 0
          %760 = vmatpush1.bf16.msra.mxu0 %v736
          %761 = vmatprep.subr.bf16.mxu0 0
          %762 = vmatpush1.bf16.msra.mxu0 0
          %763 = vmatprep.subr.bf16.mxu0 0
          %764 = vmatpush1.bf16.msra.mxu0 0
          %765 = vmatprep.subr.bf16.mxu0 0
          %766 = vmatpush1.bf16.msra.mxu0 0
          %767 = vmatprep.subr.bf16.mxu0 0
          %768 = vmatpush1.bf16.msra.mxu0 0
          %769 = vmatprep.subr.bf16.mxu0 0
          %770 = vmatpush1.bf16.msra.mxu0 0
          %771 = vmatprep.subr.bf16.mxu0 0
          %772 = vmatpush1.bf16.msra.mxu0 0
          %773 = vmatprep.subr.bf16.mxu0 0
          %774 = vmatpush1.bf16.msra.mxu0 0
          %775 = vmatprep.subr.bf16.mxu0 0
          %776 = vmatpush1.bf16.msra.mxu0 0
          %777 = vmatprep.mubr.bf16.mxu0 0
          %778 = vmatmul.mubr.bf16.gmra.mrb[0].mxu0 %v673
          %v779 = vpop.f32.mrb[0].mxu0
          %v780 = vadd.f32 %v695, %v779
          %v781 = vpop.f32.mrb[0].mxu0
          %v782 = vpop.f32.mrb[0].mxu0
          %v783 = vpop.f32.mrb[0].mxu0
          %784 = vdwg.mxu0
          %785 = vst [vmem:[#allocation9] sm:$0xff] %v780
        $region60: #{_moe_forward_jit.1} parent=39 // pred_fallthru
          _
        // Predicated region
        $region61: #{_moe_forward_jit.1} parent=39 // pred_check
          %p786 = pneg %p170
        $region62: #{_moe_forward_jit.1} parent=39 // pred_check_branch
          %788 = sbr.rel (%p786) target = $region64
        $region63: #{_moe_forward_jit.1} parent=39 // pred_region
          %s790 = ssub.s32 128, 128
          %791 = vsyncadd [#allocation5], %s790
          %s792 = smul.addr %s27, 128
          %s793 = scalar_lea.hbm %s5, %s792
          %s795 = sshll.u32 [#allocation9], 4
          %s796 = int_to_ptr.vmem [resolvable:$true] %s795
          %798 = dma.vmem_to_hbm [thread:$0]  %s796, 128, %s793, [#allocation5]
        $region64: #{_moe_forward_jit.1} parent=39 // pred_fallthru
          _
        // Predicated region
        $region65: #{_moe_forward_jit.1} parent=39 // pred_check
          %p799 = pneg %p170
        $region66: #{_moe_forward_jit.1} parent=39 // pred_check_branch
          %801 = sbr.rel (%p799) target = $region68
        $region67: #{_moe_forward_jit.1} parent=39 // pred_region
          %802 = dma.done [#allocation5], 128
        $region68: #{_moe_forward_jit.1} parent=39 // pred_fallthru
          _
      $region40: #{_moe_forward_jit.1} parent=5 // pred_fallthru
        _
      %p803 = scmp.le.s32.totalorder 2, %s18
      // Predicated region
      $region69: #{_moe_forward_jit.1} parent=5 // pred_check
        %p804 = pneg %p803
      $region70: #{_moe_forward_jit.1} parent=5 // pred_check_branch
        %806 = sbr.rel (%p804) target = $region72
      $region71: #{_moe_forward_jit.1} parent=5 // pred_region
        %s807 = ssub.s32 %s18, 2
      $region72: #{_moe_forward_jit.1} parent=5 // pred_fallthru
        _
    $region6: #{_moe_forward_jit.1} parent=1 // loop_footer
      %s22 = sadd.s32 1, %s18
    $region7: #{_moe_forward_jit.1} parent=1 // loop_footer_branch
      %17 = sbr.rel target = $region3
    $region8: #{_moe_forward_jit.1} parent=1 // loop_exit
      _
    %808 = vsyncpa [#allocation4], 1
    %s809 = scalar_lea.sflag [#allocation4], 1
    %810 = vsyncpa %s809, 1
    %811 = vsyncpa [#allocation7], 1
    %s812 = scalar_lea.sflag [#allocation7], 1
    %813 = vsyncpa %s812, 1
    %814 = vsyncpa [#allocation5], 1
    %s815 = scalar_lea.sflag [#allocation5], 1
    %816 = vsyncpa %s815, 1

</llo_original>
